<compile_context>
chip_gen: v7x
topology: tpu7x:2x2x1
jax: 0.10.0
libtpu: 0.0.40
codegen_flags: <defaults>
</compile_context>

<pallas_src>
import jax
import jax.numpy as jnp
from jax.experimental import pallas as pl
from jax.experimental.pallas import tpu as pltpu

EPS = 1e-5  # nn.LayerNorm default


def _ln_kernel(x_ref, w_ref, b_ref, o_ref):
    # x_ref: (tb, C, t_s) block — C on sublanes (reduced), spatial on lanes.
    # w_ref/b_ref: (1, C, t_s) folded, lane-dense affine params (resident).
    x = x_ref[...].astype(jnp.float32)
    mean = jnp.mean(x, axis=1, keepdims=True)                   # (tb, 1, t_s)
    mean_sq = jnp.mean(x * x, axis=1, keepdims=True)            # one-pass variance
    var = jnp.maximum(mean_sq - mean * mean, 0.0)               # guard tiny cancellation
    inv = jax.lax.rsqrt(var + EPS)                              # (tb, 1, t_s)

    w = w_ref[...].astype(jnp.float32)
    b = b_ref[...].astype(jnp.float32)

    # Epilogue streams x from VMEM again: only the small (tb, 1, t_s) stats cross
    # the reduction boundary; no block-sized temp is held across it.
    xe = x_ref[...].astype(jnp.float32)
    o_ref[...] = ((xe - mean) * inv * w + b).astype(o_ref.dtype)


def layer_normalization(x, ln_weight, ln_bias, gamma, beta, *,
                        target_block_bytes=4 * 1024 * 1024):
    """x: (N, C, H, W). Returns (N, C, H, W) matching the PyTorch module."""
    N, C, H, W = x.shape
    S = H * W
    x3 = x.reshape(N, C, S)  # free view: no HBM data movement

    itemsize = jnp.dtype(x.dtype).itemsize
    # Sublane packing: 8 rows/vreg for f32, 16 for bf16, 32 for int8.
    pack = max(1, 32 // itemsize)
    c_pad = pl.cdiv(C, pack) * pack          # physical sublane footprint of C
    c_pad_f32 = pl.cdiv(C, 8) * 8            # footprint of f32 intermediates/params

    # ---- spatial (lane) tile: 128-multiple capped by the PADDED byte budget ----
    if S < 128:
        t_s = S                              # full-extent block dim is always legal
    else:
        max_ts = max(128, (target_block_bytes // (c_pad * itemsize)) // 128 * 128)
        t_s = int(min((S // 128) * 128, max_ts))

    # ---- batch tile: grow the block toward the padded byte budget --------------
    tb = int(max(1, min(N, target_block_bytes // max(1, c_pad * t_s * itemsize))))

    # ---- megacore balance: guarantee >= 2 grid blocks (v7x has 2 TensorCores) --
    if pl.cdiv(N, tb) * pl.cdiv(S, t_s) < 2:
        if S >= 2 * 128:
            t_s = max(128, ((S // 2) // 128) * 128)
        elif N >= 2:
            tb = pl.cdiv(N, 2)
        # else: problem is genuinely a single tiny block.

    grid = (pl.cdiv(N, tb), pl.cdiv(S, t_s))

    # ---- fold (xn*w + b)*g + be == xn*(w*g) + (b*g + be); lane-dense params ----
    g_flat = gamma.reshape(C).astype(jnp.float32)
    be_flat = beta.reshape(C).astype(jnp.float32)
    w_eff = jnp.broadcast_to(
        (ln_weight.astype(jnp.float32) * g_flat).reshape(1, C, 1), (1, C, t_s))
    b_eff = jnp.broadcast_to(
        (ln_bias.astype(jnp.float32) * g_flat + be_flat).reshape(1, C, 1), (1, C, t_s))

    # ---- right-sized VMEM limit from the padded footprint (<= 40 MiB) ----------
    blk_bytes = tb * c_pad * t_s * itemsize            # one in/out buffer (padded)
    f32_blk_bytes = tb * c_pad_f32 * t_s * 4           # transient f32 intermediates
    param_bytes = 2 * c_pad_f32 * t_s * 4              # resident folded params
    est = 4 * blk_bytes + 2 * f32_blk_bytes + 2 * param_bytes + (2 << 20)
    vmem_limit = int(min(40 * 1024 * 1024, max(est, 16 * 1024 * 1024)))

    out3 = pl.pallas_call(
        _ln_kernel,
        out_shape=jax.ShapeDtypeStruct((N, C, S), x.dtype),
        grid_spec=pltpu.PrefetchScalarGridSpec(
            num_scalar_prefetch=0,
            grid=grid,
            in_specs=[
                pl.BlockSpec((tb, C, t_s), lambda i, j: (i, 0, j)),
                pl.BlockSpec((1, C, t_s), lambda i, j: (0, 0, 0)),
                pl.BlockSpec((1, C, t_s), lambda i, j: (0, 0, 0)),
            ],
            out_specs=pl.BlockSpec((tb, C, t_s), lambda i, j: (i, 0, j)),
        ),
        compiler_params=pltpu.CompilerParams(
            dimension_semantics=("parallel", "parallel"),
            vmem_limit_bytes=vmem_limit,
        ),
    )(x3, w_eff, b_eff)

    return out3.reshape(N, C, H, W)


def _reference(x, ln_weight, ln_bias, gamma, beta):
    # Pure-JAX reference with the *unfolded* PyTorch math (two-pass variance).
    xh = jnp.transpose(x.astype(jnp.float32), (0, 2, 3, 1))
    mean = jnp.mean(xh, axis=-1, keepdims=True)
    var = jnp.mean((xh - mean) ** 2, axis=-1, keepdims=True)
    ref = (xh - mean) * jax.lax.rsqrt(var + EPS) * ln_weight + ln_bias
    return jnp.transpose(ref, (0, 3, 1, 2)) * gamma + beta


if __name__ == "__main__":
    key = jax.random.PRNGKey(0)
    k_x, k_w, k_b, k_g, k_be, k_x2 = jax.random.split(key, 6)

    # Case 1: small NCHW input; non-trivial params so the affine folding and the
    # LayerNorm affine path are actually exercised. Grid is forced to 2 blocks.
    N, C, H, W = 2, 4, 16, 16
    x = jax.random.normal(k_x, (N, C, H, W), dtype=jnp.float32)
    ln_weight = 1.0 + 0.1 * jax.random.normal(k_w, (C,), dtype=jnp.float32)
    ln_bias = 0.1 * jax.random.normal(k_b, (C,), dtype=jnp.float32)
    gamma = 1.0 + 0.1 * jax.random.normal(k_g, (1, C, 1, 1), dtype=jnp.float32)
    beta = 0.1 * jax.random.normal(k_be, (1, C, 1, 1), dtype=jnp.float32)

    out = layer_normalization(x, ln_weight, ln_bias, gamma, beta)
    out = jax.block_until_ready(out)
    ref = _reference(x, ln_weight, ln_bias, gamma, beta)
    assert jnp.allclose(out, ref, atol=1e-5, rtol=1e-5), "mismatch vs reference (case 1)"

    # Case 2: ragged spatial tiling (S=400 with a 128-wide lane tile -> masked
    # tail block) plus a tiny byte budget, exercising edge masking and tb=1.
    x2 = jax.random.normal(k_x2, (2, C, 16, 25), dtype=jnp.float32)
    out2 = layer_normalization(x2, ln_weight, ln_bias, gamma, beta,
                               target_block_bytes=4096)
    out2 = jax.block_until_ready(out2)
    ref2 = _reference(x2, ln_weight, ln_bias, gamma, beta)
    assert jnp.allclose(out2, ref2, atol=1e-5, rtol=1e-5), "mismatch vs reference (case 2)"

    # Case 3: bf16 input exercises the padding-aware accounting (sublane pack=16)
    # and the in-kernel f32 compute path; reference uses the same quantized input.
    x3 = x.astype(jnp.bfloat16)
    out3 = layer_normalization(x3, ln_weight, ln_bias, gamma, beta)
    out3 = jax.block_until_ready(out3)
    ref3 = _reference(x3.astype(jnp.float32), ln_weight, ln_bias, gamma, beta)
    assert jnp.allclose(out3.astype(jnp.float32), ref3, atol=2e-2, rtol=2e-2), \
        "mismatch vs reference (case 3, bf16)"

    print("KERNEL_OK")
</pallas_src>

<mosaic_0001>
module attributes {stable_mosaic.version = 11 : i64} {
  func.func @_ln_kernel(%arg0: i32, %arg1: i32, %arg2: memref<2x4x128xf32, #tpu.memory_space<vmem>>, %arg3: memref<1x4x128xf32, #tpu.memory_space<vmem>>, %arg4: memref<1x4x128xf32, #tpu.memory_space<vmem>>, %arg5: memref<2x4x128xf32, #tpu.memory_space<vmem>>) attributes {dimension_semantics = [#tpu.dimension_semantics<parallel>, #tpu.dimension_semantics<parallel>], iteration_bounds = array<i64: 1, 2>, scalar_prefetch = 0 : i64, scratch_operands = 0 : i64, tpu.core_type = #tpu.core_type<tc>, window_params = [{transform_indices = @transform_0, window_bounds = array<i64: 2, 4, 128>}, {pipeline_mode = #tpu.pipeline_mode<synchronous>, transform_indices = @transform_1, window_bounds = array<i64: 1, 4, 128>}, {pipeline_mode = #tpu.pipeline_mode<synchronous>, transform_indices = @transform_2, window_bounds = array<i64: 1, 4, 128>}, {transform_indices = @transform_3, window_bounds = array<i64: 2, 4, 128>}]} {
    %c0 = arith.constant 0 : index
    %c0_0 = arith.constant 0 : index
    %c0_1 = arith.constant 0 : index
    %0 = vector.load %arg2[%c0, %c0_0, %c0_1] : memref<2x4x128xf32, #tpu.memory_space<vmem>>, vector<2x4x128xf32>
    %cst = arith.constant dense<0.000000e+00> : vector<2x128xf32>
    %1 = vector.multi_reduction <add>, %0, %cst [1] : vector<2x4x128xf32> to vector<2x128xf32>
    %2 = vector.shape_cast %1 : vector<2x128xf32> to vector<2x1x128xf32>
    %cst_2 = arith.constant 4.000000e+00 : f32
    %3 = vector.broadcast %cst_2 : f32 to vector<2x1x128xf32>
    %4 = arith.divf %2, %3 : vector<2x1x128xf32>
    %5 = arith.mulf %0, %0 : vector<2x4x128xf32>
    %cst_3 = arith.constant dense<0.000000e+00> : vector<2x128xf32>
    %6 = vector.multi_reduction <add>, %5, %cst_3 [1] : vector<2x4x128xf32> to vector<2x128xf32>
    %7 = vector.shape_cast %6 : vector<2x128xf32> to vector<2x1x128xf32>
    %cst_4 = arith.constant 4.000000e+00 : f32
    %8 = vector.broadcast %cst_4 : f32 to vector<2x1x128xf32>
    %9 = arith.divf %7, %8 : vector<2x1x128xf32>
    %10 = arith.mulf %4, %4 : vector<2x1x128xf32>
    %11 = arith.subf %9, %10 : vector<2x1x128xf32>
    %cst_5 = arith.constant 0.000000e+00 : f32
    %12 = vector.broadcast %cst_5 : f32 to vector<2x1x128xf32>
    %13 = arith.maximumf %11, %12 : vector<2x1x128xf32>
    %cst_6 = arith.constant 9.99999974E-6 : f32
    %14 = vector.broadcast %cst_6 : f32 to vector<2x1x128xf32>
    %15 = arith.addf %13, %14 : vector<2x1x128xf32>
    %16 = math.rsqrt %15 : vector<2x1x128xf32>
    %c0_7 = arith.constant 0 : index
    %c0_8 = arith.constant 0 : index
    %c0_9 = arith.constant 0 : index
    %17 = vector.load %arg3[%c0_7, %c0_8, %c0_9] : memref<1x4x128xf32, #tpu.memory_space<vmem>>, vector<1x4x128xf32>
    %c0_10 = arith.constant 0 : index
    %c0_11 = arith.constant 0 : index
    %c0_12 = arith.constant 0 : index
    %18 = vector.load %arg4[%c0_10, %c0_11, %c0_12] : memref<1x4x128xf32, #tpu.memory_space<vmem>>, vector<1x4x128xf32>
    %c0_13 = arith.constant 0 : index
    %c0_14 = arith.constant 0 : index
    %c0_15 = arith.constant 0 : index
    %19 = vector.load %arg2[%c0_13, %c0_14, %c0_15] : memref<2x4x128xf32, #tpu.memory_space<vmem>>, vector<2x4x128xf32>
    %20 = vector.broadcast %4 : vector<2x1x128xf32> to vector<2x4x128xf32>
    %21 = arith.subf %19, %20 : vector<2x4x128xf32>
    %22 = vector.broadcast %16 : vector<2x1x128xf32> to vector<2x4x128xf32>
    %23 = arith.mulf %21, %22 : vector<2x4x128xf32>
    %24 = vector.broadcast %17 : vector<1x4x128xf32> to vector<2x4x128xf32>
    %25 = arith.mulf %23, %24 : vector<2x4x128xf32>
    %26 = vector.broadcast %18 : vector<1x4x128xf32> to vector<2x4x128xf32>
    %27 = arith.addf %25, %26 : vector<2x4x128xf32>
    %c0_16 = arith.constant 0 : index
    %c0_17 = arith.constant 0 : index
    %c0_18 = arith.constant 0 : index
    %28 = vector.load %arg5[%c0_16, %c0_17, %c0_18] : memref<2x4x128xf32, #tpu.memory_space<vmem>>, vector<2x4x128xf32>
    tpu.vector_store %arg5[%c0_16, %c0_17, %c0_18], %27 {strides = array<i32>} : memref<2x4x128xf32, #tpu.memory_space<vmem>>, vector<2x4x128xf32>,
    return
  }
  func.func @transform_0(%arg0: i32, %arg1: i32) -> (i32, i32, i32) {
    %c0_i32 = arith.constant 0 : i32
    %c0_i32_0 = arith.constant 0 : i32
    return %arg0, %c0_i32, %arg1 : i32, i32, i32
  }
  func.func @transform_1(%arg0: i32, %arg1: i32) -> (i32, i32, i32) {
    %c0_i32 = arith.constant 0 : i32
    %c0_i32_0 = arith.constant 0 : i32
    %c0_i32_1 = arith.constant 0 : i32
    %c0_i32_2 = arith.constant 0 : i32
    return %c0_i32, %c0_i32_0, %c0_i32_1 : i32, i32, i32
  }
  func.func @transform_2(%arg0: i32, %arg1: i32) -> (i32, i32, i32) {
    %c0_i32 = arith.constant 0 : i32
    %c0_i32_0 = arith.constant 0 : i32
    %c0_i32_1 = arith.constant 0 : i32
    %c0_i32_2 = arith.constant 0 : i32
    return %c0_i32, %c0_i32_0, %c0_i32_1 : i32, i32, i32
  }
  func.func @transform_3(%arg0: i32, %arg1: i32) -> (i32, i32, i32) {
    %c0_i32 = arith.constant 0 : i32
    %c0_i32_0 = arith.constant 0 : i32
    return %arg0, %c0_i32, %arg1 : i32, i32, i32
  }
}

</mosaic_0001>

<llo_original>
// kernel: tpu_custom_call.1
$region0: #{tpu_custom_call.1}
  #allocation0 [shape = 'u32[]', space=smem, size = 0x4, offset = 0x4, fixed_abs, tag = 'smem constant byte address 0x4 - core index']
  #allocation1 [shape = 'u32[144,128]{1,0:T(1,128)}', space=vmem, size = 0x12000, scoped, tag = 'internal scratch']
  %s0 = inlined_call_operand.hbm [shape: f32[2,4,256], index: 0, kind: input, shape index: {}]
  %s1 = inlined_call_operand.hbm [shape: f32[1,4,128], index: 1, kind: input, shape index: {}]
  %s2 = inlined_call_operand.vmem [shape: f32[1,4,128], index: 2, kind: input, shape index: {}]
  %s3 = inlined_call_operand.hbm [shape: f32[2,4,256], index: 3, kind: output, shape index: {}]
  %s4 = sld [smem:[#allocation0]]
  $region53: #{tpu_custom_call.1} parent=0
    _
  %s6 = ssub.s32 1, %s4
  %s7 = scalar_select 0, %s6, %s4
  $region1: #{tpu_custom_call.1} parent=0
    #allocation2 [shape = 'u8[8192]{0}', space=vmem, size = 0x2000, scoped, tag = 'input window, operand 0']
    #allocation3 [shape = 's32[2]{0}', space=sflag, size = 0x8, scoped, tag = 'scoped memory for tpu_custom_call.1']
    #allocation4 [shape = 's32[2]{0}', space=sflag, size = 0x8, scoped, tag = 'scoped memory for tpu_custom_call.1']
    #allocation5 [shape = 'u8[2048]{0}', space=vmem, size = 0x800, scoped, tag = 'input window, operand 1, single buffered']
    #allocation6 [shape = 's32[1]{0}', space=sflag, size = 0x4, scoped, tag = 'scoped memory for tpu_custom_call.1']
    #allocation7 [shape = 'u8[8192]{0}', space=vmem, size = 0x2000, scoped, tag = 'output window, operand 0']
    %8 = vsyncpa [#allocation3], 0
    %s9 = scalar_lea.sflag [#allocation3], 1
    %10 = vsyncpa %s9, 0
    %11 = vsyncpa [#allocation6], 0
    %12 = vsyncpa [#allocation4], 0
    %s13 = scalar_lea.sflag [#allocation4], 1
    %14 = vsyncpa %s13, 0
    loop: start=0, step=1, limit=4
    $region2: #{tpu_custom_call.1} parent=1 // loop_pre_header
      _
    $region3: #{tpu_custom_call.1} parent=1 // loop_header
      %s16 = sphi 0, %s20
      %p17 = scmp.ge.s32.totalorder %s16, 4
      %s23 = sphi 0, %s35
      %s24 = sphi 0, %s31
      %s25 = sphi 0, %s23
      %s26 = sphi 0, %s24
      %s27 = sphi 0, %s25
      %s28 = sphi 0, %s26
      %s40 = sphi 0, %s42
      %s43 = sphi 0, %s40
      %s44 = sphi 0, %s43
      %s60 = sphi 0, %s44
      %s64 = sphi 0, %s64
      %s66 = sphi 0, %s64
      %s67 = sphi 0, %s66
      %s81 = sphi 0, %s67
      %s85 = sphi 0, %s85
      %s87 = sphi 0, %s85
      %s88 = sphi 0, %s87
      %s102 = sphi 0, %s88
      %s110 = sphi 0, %s112
      %s113 = sphi 0, %s110
      %s114 = sphi 0, %s113
      %s130 = sphi 0, %s114
    $region4: #{tpu_custom_call.1} parent=1 // loop_header_branch
      %19 = sbr.rel (%p17) target = $region8
    $region5: #{tpu_custom_call.1} parent=1 // loop_body
      %s21 = ssub.s32 %s16, 1
      %s22 = ssub.s32 %s16, 2
      %s29 = sadd.s32 1, %s24
      %p30 = scmp.ge.s32.totalorder %s29, 2
      %s31 = scalar_select %p30, 0, %s29
      %s32 = sadd.s32 1, %s23
      %s33 = scalar_select %p30, %s32, %s23
      %p34 = scmp.ge.s32.totalorder %s33, 1
      %s35 = scalar_select %p34, 0, %s33
      %s36 = ssub.s32 %s23, %s35
      %s37 = ssub.s32 %s24, %s31
      %s38 = sor.u32 %s36, %s37
      %p39 = scmp.eq.s32.totalorder %s38, 0
      %s41 = sadd.s32 %s40, 1
      %s42 = scalar_select %p39, %s40, %s41
      %p45 = pneg %p39
      %p46 = scmp.eq.s32.totalorder %s16, 1
      %p47 = por %p45, %p46
      %p48 = scmp.ne.s32.totalorder %s40, %s43
      %p49 = scmp.eq.s32.totalorder %s16, 0
      %p50 = por %p48, %p49
      %p51 = scmp.ne.s32.totalorder %s40, %s43
      %p52 = scmp.eq.s32.totalorder %s21, 1
      %p53 = por %p51, %p52
      %p54 = scmp.ne.s32.totalorder %s43, %s44
      %p55 = scmp.eq.s32.totalorder %s21, 0
      %p56 = por %p54, %p55
      %p57 = scmp.ne.s32.totalorder %s43, %s44
      %p58 = scmp.eq.s32.totalorder %s22, 1
      %p59 = por %p57, %p58
      %p61 = scmp.ne.s32.totalorder %s44, %s60
      %p62 = scmp.eq.s32.totalorder %s22, 0
      %p63 = por %p61, %p62
      %s65 = sadd.s32 %s64, 1
      %p68 = scmp.eq.s32.totalorder %s16, 1
      %p69 = scmp.ne.s32.totalorder %s64, %s66
      %p70 = scmp.eq.s32.totalorder %s16, 0
      %p71 = por %p69, %p70
      %p72 = scmp.ne.s32.totalorder %s64, %s66
      %p73 = scmp.eq.s32.totalorder %s21, 1
      %p74 = por %p72, %p73
      %p75 = scmp.ne.s32.totalorder %s66, %s67
      %p76 = scmp.eq.s32.totalorder %s21, 0
      %p77 = por %p75, %p76
      %p78 = scmp.ne.s32.totalorder %s66, %s67
      %p79 = scmp.eq.s32.totalorder %s22, 1
      %p80 = por %p78, %p79
      %p82 = scmp.ne.s32.totalorder %s67, %s81
      %p83 = scmp.eq.s32.totalorder %s22, 0
      %p84 = por %p82, %p83
      %s86 = sadd.s32 %s85, 1
      %p89 = scmp.eq.s32.totalorder %s16, 1
      %p90 = scmp.ne.s32.totalorder %s85, %s87
      %p91 = scmp.eq.s32.totalorder %s16, 0
      %p92 = por %p90, %p91
      %p93 = scmp.ne.s32.totalorder %s85, %s87
      %p94 = scmp.eq.s32.totalorder %s21, 1
      %p95 = por %p93, %p94
      %p96 = scmp.ne.s32.totalorder %s87, %s88
      %p97 = scmp.eq.s32.totalorder %s21, 0
      %p98 = por %p96, %p97
      %p99 = scmp.ne.s32.totalorder %s87, %s88
      %p100 = scmp.eq.s32.totalorder %s22, 1
      %p101 = por %p99, %p100
      %p103 = scmp.ne.s32.totalorder %s88, %s102
      %p104 = scmp.eq.s32.totalorder %s22, 0
      %p105 = por %p103, %p104
      %s106 = ssub.s32 %s23, %s35
      %s107 = ssub.s32 %s24, %s31
      %s108 = sor.u32 %s106, %s107
      %p109 = scmp.eq.s32.totalorder %s108, 0
      %s111 = sadd.s32 %s110, 1
      %s112 = scalar_select %p109, %s110, %s111
      %p115 = pneg %p109
      %p116 = scmp.eq.s32.totalorder %s16, 1
      %p117 = por %p115, %p116
      %p118 = scmp.ne.s32.totalorder %s110, %s113
      %p119 = scmp.eq.s32.totalorder %s16, 0
      %p120 = por %p118, %p119
      %p121 = scmp.ne.s32.totalorder %s110, %s113
      %p122 = scmp.eq.s32.totalorder %s21, 1
      %p123 = por %p121, %p122
      %p124 = scmp.ne.s32.totalorder %s113, %s114
      %p125 = scmp.eq.s32.totalorder %s21, 0
      %p126 = por %p124, %p125
      %p127 = scmp.ne.s32.totalorder %s113, %s114
      %p128 = scmp.eq.s32.totalorder %s22, 1
      %p129 = por %p127, %p128
      %p131 = scmp.ne.s32.totalorder %s114, %s130
      %p132 = scmp.eq.s32.totalorder %s22, 0
      %p133 = por %p131, %p132
      %p134 = scmp.le.s32.totalorder 1, %s16
      %p135 = scmp.lt.s32.totalorder %s16, 3
      %p136 = pnand %p134, %p135
      %p137 = pneg %p136
      // Predicated region
      $region9: #{tpu_custom_call.1} parent=5 // pred_check
        _
      $region10: #{tpu_custom_call.1} parent=5 // pred_check_branch
        %139 = sbr.rel (%p136) target = $region12
      $region11: #{tpu_custom_call.1} parent=5 // pred_region
        %s140 = ssub.s32 %s16, 1
        // Predicated region
        $region13: #{tpu_custom_call.1} parent=11 // pred_check
          %p141 = pneg %p77
        $region14: #{tpu_custom_call.1} parent=11 // pred_check_branch
          %143 = sbr.rel (%p141) target = $region16
        $region15: #{tpu_custom_call.1} parent=11 // pred_region
          %s145 = ssub.s32 64, 64
          %146 = vsyncadd [#allocation6], %s145
          %s148 = sshll.u32 [#allocation5], 4
          %s149 = int_to_ptr.vmem [resolvable:$true] %s148
          %151 = dma.hbm_to_vmem [thread:$0]  %s1, 64, %s149, [#allocation6]
        $region16: #{tpu_custom_call.1} parent=11 // pred_fallthru
          _
        // Predicated region
        $region17: #{tpu_custom_call.1} parent=11 // pred_check
          %p152 = pneg %p98
        $region18: #{tpu_custom_call.1} parent=11 // pred_check_branch
          %154 = sbr.rel (%p152) target = $region20
        $region19: #{tpu_custom_call.1} parent=11 // pred_region
          _
        $region20: #{tpu_custom_call.1} parent=11 // pred_fallthru
          _
      $region12: #{tpu_custom_call.1} parent=5 // pred_fallthru
        _
      %p155 = scmp.lt.s32.totalorder %s16, 2
      // Predicated region
      $region21: #{tpu_custom_call.1} parent=5 // pred_check
        %p156 = pneg %p155
      $region22: #{tpu_custom_call.1} parent=5 // pred_check_branch
        %158 = sbr.rel (%p156) target = $region24
      $region23: #{tpu_custom_call.1} parent=5 // pred_region
        // Predicated region
        $region25: #{tpu_custom_call.1} parent=23 // pred_check
          %p159 = pneg %p50
        $region26: #{tpu_custom_call.1} parent=23 // pred_check_branch
          %161 = sbr.rel (%p159) target = $region28
        $region27: #{tpu_custom_call.1} parent=23 // pred_region
          %s162 = sand.u32 %s40, 1
          %s163 = scalar_lea.sflag [#allocation3], %s162
          %s164 = sand.u32 %s40, 1
          %s165 = smul.addr %s164, 8
          %s166 = scalar_lea.vmem [#allocation2], %s165
          %s167 = smul.u32 2, %s23
          %s169 = ssub.s32 128, 128
          %170 = vsyncadd %s163, %s169
          %s171 = smul.addr %s167, 2
          %s172 = sadd.s32 %s24, %s171
          %s173 = smul.addr %s172, 64
          %s174 = scalar_lea.hbm %s0, %s173
          %s175 = sshll.u32 %s166, 4
          %s176 = int_to_ptr.vmem [resolvable:$true] %s175
          %181 = dma.hbm_to_vmem [thread:$0]  %s174, 128, %s176, %s163, 128, 64, 4
        $region28: #{tpu_custom_call.1} parent=23 // pred_fallthru
          _
      $region24: #{tpu_custom_call.1} parent=5 // pred_fallthru
        _
      %p182 = scmp.le.s32.totalorder 1, %s16
      %p183 = scmp.lt.s32.totalorder %s16, 3
      %p184 = pnand %p182, %p183
      %p185 = pneg %p184
      // Predicated region
      $region29: #{tpu_custom_call.1} parent=5 // pred_check
        _
      $region30: #{tpu_custom_call.1} parent=5 // pred_check_branch
        %187 = sbr.rel (%p184) target = $region32
      $region31: #{tpu_custom_call.1} parent=5 // pred_region
        %s188 = ssub.s32 %s16, 1
        %s189 = sand.u32 %s43, 1
        %s190 = scalar_lea.sflag [#allocation3], %s189
        %s191 = sand.u32 %s43, 1
        %s192 = smul.addr %s191, 8
        %s193 = scalar_lea.vmem [#allocation2], %s192
        // Predicated region
        $region33: #{tpu_custom_call.1} parent=31 // pred_check
          %p194 = pneg %p56
        $region34: #{tpu_custom_call.1} parent=31 // pred_check_branch
          %196 = sbr.rel (%p194) target = $region36
        $region35: #{tpu_custom_call.1} parent=31 // pred_region
          %197 = dma.done %s190, 128
        $region36: #{tpu_custom_call.1} parent=31 // pred_fallthru
          _
        // Predicated region
        $region37: #{tpu_custom_call.1} parent=31 // pred_check
          %p198 = pneg %p77
        $region38: #{tpu_custom_call.1} parent=31 // pred_check_branch
          %200 = sbr.rel (%p198) target = $region40
        $region39: #{tpu_custom_call.1} parent=31 // pred_region
          %201 = dma.done [#allocation6], 64
        $region40: #{tpu_custom_call.1} parent=31 // pred_fallthru
          _
        %s202 = sand.u32 %s43, 1
        %s203 = scalar_lea.sflag [#allocation3], %s202
        %s204 = sand.u32 %s43, 1
        %s205 = smul.addr %s204, 8
        %s206 = scalar_lea.vmem [#allocation2], %s205
        %p207 = pneg %p56
        %p208 = pneg %p53
        %p209 = pneg %p77
        %p210 = pneg %p74
        %p211 = pneg %p98
        %p212 = pneg %p95
        %p213 = pneg %p126
        %p214 = pneg %p123
        %s215 = sand.u32 %s113, 1
        %s216 = scalar_lea.sflag [#allocation4], %s215
        %s217 = sand.u32 %s113, 1
        %s218 = smul.addr %s217, 8
        %s219 = scalar_lea.vmem [#allocation7], %s218
        %s220 = smul.u32 2, %s25
        %s221 = smul.u32 2, %s25
        %v222 = vld [vmem:[%s193] sm:$0xf]
        %v223 = vld [vmem:[%s193 + $0x4] sm:$0xf]
        %vm224 = vcmask 1043456
        %v225 = vsel %vm224, %v222, 0.0
        %v226 = vrot.slane %v225, 4
        %v227 = vadd.f32 %v225, %v226
        %v228 = vrot.slane %v227, 2
        %v229 = vadd.f32 %v227, %v228
        %v230 = vrot.slane %v229, 1
        %v231 = vadd.f32 %v229, %v230
        %v232 = vsel %vm224, %v223, 0.0
        %v233 = vrot.slane %v232, 4
        %v234 = vadd.f32 %v232, %v233
        %v235 = vrot.slane %v234, 2
        %v236 = vadd.f32 %v234, %v235
        %v237 = vrot.slane %v236, 1
        %v238 = vadd.f32 %v236, %v237
        %v239 = vrcp.pop 4.0
        %v240 = vmul.f32 %v231, %v239
        %v241 = vmul.f32 %v238, %v239
        %v242 = vmul.f32 %v222, %v222
        %v243 = vmul.f32 %v223, %v223
        %v244 = vsel %vm224, %v242, 0.0
        %v245 = vrot.slane %v244, 4
        %v246 = vadd.f32 %v244, %v245
        %v247 = vrot.slane %v246, 2
        %v248 = vadd.f32 %v246, %v247
        %v249 = vrot.slane %v248, 1
        %v250 = vadd.f32 %v248, %v249
        %v251 = vsel %vm224, %v243, 0.0
        %v252 = vrot.slane %v251, 4
        %v253 = vadd.f32 %v251, %v252
        %v254 = vrot.slane %v253, 2
        %v255 = vadd.f32 %v253, %v254
        %v256 = vrot.slane %v255, 1
        %v257 = vadd.f32 %v255, %v256
        %v258 = vmul.f32 %v250, %v239
        %v259 = vmul.f32 %v257, %v239
        %v260 = vmul.f32 %v240, %v240
        %v261 = vmul.f32 %v241, %v241
        %v262 = vsub.f32 %v258, %v260
        %v263 = vsub.f32 %v259, %v261
        %v264 = vmax.f32 %v262, 0.0
        %v265 = vmax.f32 %v263, 0.0
        %v266 = vadd.f32 %v264, 1e-05
        %v267 = vadd.f32 %v265, 1e-05
        %v268 = vrsqrt.pop %v266
        %v269 = vrsqrt.pop %v267
        %v270 = vld [vmem:[#allocation5] sm:$0xf]
        %v271 = vld [vmem:[%s2] sm:$0xf]
        %v272 = vsub.f32 %v222, %v240
        %v273 = vsub.f32 %v223, %v241
        %v274 = vmul.f32 %v272, %v268
        %v275 = vmul.f32 %v273, %v269
        %v276 = vmul.f32 %v274, %v270
        %v277 = vmul.f32 %v275, %v270
        %v278 = vadd.f32 %v276, %v271
        %v279 = vadd.f32 %v277, %v271
        %280 = vst [vmem:[%s219] sm:$0xf] %v278
        %281 = vst [vmem:[%s219 + $0x4] sm:$0xf] %v279
        %s282 = sand.u32 %s113, 1
        %s283 = scalar_lea.sflag [#allocation4], %s282
        %s284 = sand.u32 %s113, 1
        %s285 = smul.addr %s284, 8
        %s286 = scalar_lea.vmem [#allocation7], %s285
        // Predicated region
        $region41: #{tpu_custom_call.1} parent=31 // pred_check
          %p287 = pneg %p123
        $region42: #{tpu_custom_call.1} parent=31 // pred_check_branch
          %289 = sbr.rel (%p287) target = $region44
        $region43: #{tpu_custom_call.1} parent=31 // pred_region
          %s290 = smul.u32 2, %s25
          %s292 = ssub.s32 128, 128
          %293 = vsyncadd %s283, %s292
          %s294 = smul.addr %s290, 2
          %s295 = sadd.s32 %s26, %s294
          %s296 = smul.addr %s295, 64
          %s297 = scalar_lea.hbm %s3, %s296
          %s298 = sshll.u32 %s286, 4
          %s299 = int_to_ptr.vmem [resolvable:$true] %s298
          %304 = dma.vmem_to_hbm [thread:$0]  %s299, 128, %s297, %s283, 64, 128, 4
        $region44: #{tpu_custom_call.1} parent=31 // pred_fallthru
          _
      $region32: #{tpu_custom_call.1} parent=5 // pred_fallthru
        _
      %p305 = scmp.le.s32.totalorder 2, %s16
      // Predicated region
      $region45: #{tpu_custom_call.1} parent=5 // pred_check
        %p306 = pneg %p305
      $region46: #{tpu_custom_call.1} parent=5 // pred_check_branch
        %308 = sbr.rel (%p306) target = $region48
      $region47: #{tpu_custom_call.1} parent=5 // pred_region
        %s309 = ssub.s32 %s16, 2
        // Predicated region
        $region49: #{tpu_custom_call.1} parent=47 // pred_check
          %p310 = pneg %p129
        $region50: #{tpu_custom_call.1} parent=47 // pred_check_branch
          %312 = sbr.rel (%p310) target = $region52
        $region51: #{tpu_custom_call.1} parent=47 // pred_region
          %s313 = sand.u32 %s114, 1
          %s314 = scalar_lea.sflag [#allocation4], %s313
          %s315 = sand.u32 %s114, 1
          %s316 = smul.addr %s315, 8
          %s317 = scalar_lea.vmem [#allocation7], %s316
          %318 = dma.done %s314, 128
        $region52: #{tpu_custom_call.1} parent=47 // pred_fallthru
          _
      $region48: #{tpu_custom_call.1} parent=5 // pred_fallthru
        _
    $region6: #{tpu_custom_call.1} parent=1 // loop_footer
      %s20 = sadd.s32 1, %s16
    $region7: #{tpu_custom_call.1} parent=1 // loop_footer_branch
      %15 = sbr.rel target = $region3
    $region8: #{tpu_custom_call.1} parent=1 // loop_exit
      _
    %319 = vsyncpa [#allocation3], 1
    %s320 = scalar_lea.sflag [#allocation3], 1
    %321 = vsyncpa %s320, 1
    %322 = vsyncpa [#allocation6], 1
    %323 = vsyncpa [#allocation4], 1
    %s324 = scalar_lea.sflag [#allocation4], 1
    %325 = vsyncpa %s324, 1

</llo_original>
